<compile_context>
chip_gen: v7x
topology: tpu7x:2x2x1
jax: 0.10.0
libtpu: 0.0.40
codegen_flags: <defaults>
</compile_context>

<pallas_src>
import functools

import jax
import jax.numpy as jnp
from jax.experimental import pallas as pl
from jax.experimental.pallas import tpu as pltpu

# True (PyTorch) dims.
D_IN, D_H1, D_H2, D_OUT = 12, 144, 256, 66
# Lane-padded dims (multiples of 128 on the lane axis -> unmasked full vst).
P_H1, P_H2, P_OUT = 256, 256, 128


def _round_up(n, m):
    return (n + m - 1) // m * m


def _device_kind():
    try:
        return jax.devices()[0].device_kind.lower()
    except Exception:
        return ""


def _epilogue_dtype():
    # v5e and earlier have no bf16 VPU -> keep the bias+ReLU epilogue in f32;
    # v6e/v7x do the epilogue in bf16 (half the VALU element-ops / vreg bytes).
    kind = _device_kind()
    if any(v in kind for v in ("v2", "v3", "v4", "v5")):
        return jnp.float32
    return jnp.bfloat16


def _default_tile_b():
    # v7x: 64 MiB VMEM + 2 TensorCores -> smaller tile so grid >= 2 steps sooner.
    return 2048 if "v7" in _device_kind() else 4096


def _mlp_kernel(x_ref, w1_ref, b1_ref, w2_ref, b2_ref, w3_ref, b3_ref, o_ref,
                *, n_chunks, epi_dtype):
    # One batch tile per grid step: 3 MXU matmuls (bf16 in, f32 acc) + bias/ReLU
    # epilogue in epi_dtype.  The tile is split into n_chunks unrolled
    # sub-chunks so the epilogue of chunk c co-issues with chunk c+1's matmuls.
    tb = x_ref.shape[0]
    sub = tb // n_chunks
    for c in range(n_chunks):
        rows = pl.ds(c * sub, sub)
        x = x_ref[rows, :].astype(jnp.bfloat16)                     # [sub, 12]
        h1 = jnp.dot(x, w1_ref[...], preferred_element_type=jnp.float32)
        h1 = jnp.maximum(h1.astype(epi_dtype) + b1_ref[...].astype(epi_dtype),
                         0).astype(jnp.bfloat16)                    # [sub, 256]
        h2 = jnp.dot(h1, w2_ref[...], preferred_element_type=jnp.float32)
        h2 = jnp.maximum(h2.astype(epi_dtype) + b2_ref[...].astype(epi_dtype),
                         0).astype(jnp.bfloat16)                    # [sub, 256]
        h3 = jnp.dot(h2, w3_ref[...], preferred_element_type=jnp.float32)
        o_ref[rows, :] = jnp.maximum(
            h3.astype(epi_dtype) + b3_ref[...].astype(epi_dtype), 0
        ).astype(o_ref.dtype)                                       # bf16 [sub, 128]


def net_forward(x, packed_params, *, tile_b=None):
    """x: [B, 12] float32 -> [B, 66] float32 (bf16 matmuls, f32 accumulate)."""
    w1, b1, w2, b2, w3, b3 = packed_params
    B = x.shape[0]
    if tile_b is None:
        tile_b = _default_tile_b()

    # Batch tile: multiple of 32 (so sub-chunks stay bf16-sublane friendly),
    # capped at tile_b; Bp is a multiple of tb so the grid divides evenly.
    tb = min(tile_b, _round_up(B, 32))
    Bp = _round_up(B, tb)

    xf = x.astype(jnp.float32)
    if Bp != B:
        xf = jnp.pad(xf, ((0, Bp - B), (0, 0)))

    n_chunks = 2 if (tb >= 512 and tb % 32 == 0) else 1
    epi_dtype = _epilogue_dtype()

    flops = 2 * Bp * (D_IN * P_H1 + P_H1 * P_H2 + P_H2 * P_OUT)
    bytes_accessed = (
        Bp * D_IN * 4 + Bp * P_OUT * 2                      # f32 in, bf16 out
        + (w1.size + w2.size + w3.size) * 2                 # bf16 weights
        + (b1.size + b2.size + b3.size) * 4                 # f32 biases
    )

    kernel = functools.partial(_mlp_kernel, n_chunks=n_chunks,
                               epi_dtype=epi_dtype)

    out = pl.pallas_call(
        kernel,
        out_shape=jax.ShapeDtypeStruct((Bp, P_OUT), jnp.bfloat16),
        grid=(Bp // tb,),
        in_specs=[
            pl.BlockSpec((tb, D_IN), lambda i: (i, 0)),      # x tile (pipelined)
            pl.BlockSpec((D_IN, P_H1), lambda i: (0, 0)),    # W1 (resident)
            pl.BlockSpec((1, P_H1), lambda i: (0, 0)),       # b1
            pl.BlockSpec((P_H1, P_H2), lambda i: (0, 0)),    # W2
            pl.BlockSpec((1, P_H2), lambda i: (0, 0)),       # b2
            pl.BlockSpec((P_H2, P_OUT), lambda i: (0, 0)),   # W3
            pl.BlockSpec((1, P_OUT), lambda i: (0, 0)),      # b3
        ],
        out_specs=pl.BlockSpec((tb, P_OUT), lambda i: (i, 0)),
        compiler_params=pltpu.CompilerParams(
            dimension_semantics=("parallel",),               # megacore on v7x
        ),
        cost_estimate=pl.CostEstimate(
            flops=flops, transcendentals=0, bytes_accessed=bytes_accessed),
    )(xf, w1, b1, w2, b2, w3, b3)

    # Fused slice + f32 upcast to match the PyTorch f32 forward interface.
    return out[:B, :D_OUT].astype(jnp.float32)


def init_params(key):
    """Deterministic init matching PyTorch nn.Linear default:
    U(-1/sqrt(fan_in), 1/sqrt(fan_in)) for weight and bias (true shapes, f32)."""
    dims = [(D_IN, D_H1), (D_H1, D_H2), (D_H2, D_OUT)]
    params = []
    keys = jax.random.split(key, 2 * len(dims))
    for i, (fan_in, fan_out) in enumerate(dims):
        bound = 1.0 / (fan_in ** 0.5)
        w = jax.random.uniform(keys[2 * i], (fan_in, fan_out), jnp.float32,
                               minval=-bound, maxval=bound)
        b = jax.random.uniform(keys[2 * i + 1], (1, fan_out), jnp.float32,
                               minval=-bound, maxval=bound)
        params += [w, b]
    return tuple(params)


def pack_params(params):
    """Zero-pad to lane-dense shapes; weights bf16, biases f32 (cast to the
    epilogue dtype inside the kernel).  Padded rows/cols are exactly zero, so
    the padded math equals the true-shaped math on the first 66 outputs."""
    w1, b1, w2, b2, w3, b3 = params
    w1p = jnp.pad(w1, ((0, 0), (0, P_H1 - D_H1))).astype(jnp.bfloat16)            # [12, 256]
    b1p = jnp.pad(b1, ((0, 0), (0, P_H1 - D_H1)))                                  # [1, 256]
    w2p = jnp.pad(w2, ((0, P_H1 - D_H1), (0, P_H2 - D_H2))).astype(jnp.bfloat16)   # [256, 256]
    b2p = jnp.pad(b2, ((0, 0), (0, P_H2 - D_H2)))                                  # [1, 256]
    w3p = jnp.pad(w3, ((0, P_H2 - D_H2), (0, P_OUT - D_OUT))).astype(jnp.bfloat16) # [256, 128]
    b3p = jnp.pad(b3, ((0, 0), (0, P_OUT - D_OUT)))                                # [1, 128]
    return (w1p, b1p, w2p, b2p, w3p, b3p)


if __name__ == "__main__":
    key = jax.random.PRNGKey(0)
    k_x, k_p = jax.random.split(key)
    B = 8
    x = jax.random.normal(k_x, (B, D_IN), dtype=jnp.float32)
    params = init_params(k_p)
    packed = pack_params(params)

    out = jax.block_until_ready(net_forward(x, packed))
    assert out.shape == (B, D_OUT)
    assert out.dtype == jnp.float32

    # Reference with identical bf16/epilogue math as the kernel.
    epi = _epilogue_dtype()
    w1, b1, w2, b2, w3, b3 = packed
    xb = x.astype(jnp.bfloat16)
    h1 = jnp.maximum(jnp.dot(xb, w1, preferred_element_type=jnp.float32).astype(epi)
                     + b1.astype(epi), 0).astype(jnp.bfloat16)
    h2 = jnp.maximum(jnp.dot(h1, w2, preferred_element_type=jnp.float32).astype(epi)
                     + b2.astype(epi), 0).astype(jnp.bfloat16)
    h3 = jnp.maximum(jnp.dot(h2, w3, preferred_element_type=jnp.float32).astype(epi)
                     + b3.astype(epi), 0).astype(jnp.bfloat16)
    ref = h3[:, :D_OUT].astype(jnp.float32)

    assert jnp.allclose(out, ref, atol=2e-2, rtol=2e-2), \
        float(jnp.max(jnp.abs(out - ref)))

    print("KERNEL_OK")
</pallas_src>

<mosaic_0001>
module attributes {stable_mosaic.version = 11 : i64} {
  func.func @_mlp_kernel(%arg0: i32, %arg1: memref<32x12xf32, #tpu.memory_space<vmem>>, %arg2: memref<12x256xbf16, #tpu.memory_space<vmem>>, %arg3: memref<1x256xf32, #tpu.memory_space<vmem>>, %arg4: memref<256x256xbf16, #tpu.memory_space<vmem>>, %arg5: memref<1x256xf32, #tpu.memory_space<vmem>>, %arg6: memref<256x128xbf16, #tpu.memory_space<vmem>>, %arg7: memref<1x128xf32, #tpu.memory_space<vmem>>, %arg8: memref<32x128xbf16, #tpu.memory_space<vmem>>) attributes {dimension_semantics = [#tpu.dimension_semantics<parallel>], iteration_bounds = array<i64: 1>, scalar_prefetch = 0 : i64, scratch_operands = 0 : i64, tpu.core_type = #tpu.core_type<tc>, window_params = [{transform_indices = @transform_0, window_bounds = array<i64: 32, 12>}, {pipeline_mode = #tpu.pipeline_mode<synchronous>, transform_indices = @transform_1, window_bounds = array<i64: 12, 256>}, {pipeline_mode = #tpu.pipeline_mode<synchronous>, transform_indices = @transform_2, window_bounds = array<i64: 1, 256>}, {pipeline_mode = #tpu.pipeline_mode<synchronous>, transform_indices = @transform_3, window_bounds = array<i64: 256, 256>}, {pipeline_mode = #tpu.pipeline_mode<synchronous>, transform_indices = @transform_4, window_bounds = array<i64: 1, 256>}, {pipeline_mode = #tpu.pipeline_mode<synchronous>, transform_indices = @transform_5, window_bounds = array<i64: 256, 128>}, {pipeline_mode = #tpu.pipeline_mode<synchronous>, transform_indices = @transform_6, window_bounds = array<i64: 1, 128>}, {transform_indices = @transform_7, window_bounds = array<i64: 32, 128>}]} {
    %c0 = arith.constant 0 : index
    %c0_0 = arith.constant 0 : index
    %0 = vector.load %arg1[%c0, %c0_0] : memref<32x12xf32, #tpu.memory_space<vmem>>, vector<32x12xf32>
    %1 = arith.truncf %0 : vector<32x12xf32> to vector<32x12xbf16>
    %c0_1 = arith.constant 0 : index
    %c0_2 = arith.constant 0 : index
    %2 = vector.load %arg2[%c0_1, %c0_2] : memref<12x256xbf16, #tpu.memory_space<vmem>>, vector<12x256xbf16>
    %cst = arith.constant dense<0.000000e+00> : vector<32x256xf32>
    %3 = tpu.matmul %1, %2, %cst {dimension_numbers = #tpu.dot_dimension_numbers<[1], [0], [0], [1], [0, 0, 1, 1], [], []>} : vector<32x12xbf16>, vector<12x256xbf16>, vector<32x256xf32> -> vector<32x256xf32>
    %4 = arith.truncf %3 : vector<32x256xf32> to vector<32x256xbf16>
    %c0_3 = arith.constant 0 : index
    %c0_4 = arith.constant 0 : index
    %5 = vector.load %arg3[%c0_3, %c0_4] : memref<1x256xf32, #tpu.memory_space<vmem>>, vector<1x256xf32>
    %6 = arith.truncf %5 : vector<1x256xf32> to vector<1x256xbf16>
    %7 = vector.broadcast %6 : vector<1x256xbf16> to vector<32x256xbf16>
    %8 = arith.addf %4, %7 : vector<32x256xbf16>
    %cst_5 = arith.constant 0.000000e+00 : bf16
    %9 = vector.broadcast %cst_5 : bf16 to vector<32x256xbf16>
    %10 = arith.maximumf %8, %9 : vector<32x256xbf16>
    %c0_6 = arith.constant 0 : index
    %c0_7 = arith.constant 0 : index
    %11 = vector.load %arg4[%c0_6, %c0_7] : memref<256x256xbf16, #tpu.memory_space<vmem>>, vector<256x256xbf16>
    %cst_8 = arith.constant dense<0.000000e+00> : vector<32x256xf32>
    %12 = tpu.matmul %10, %11, %cst_8 {dimension_numbers = #tpu.dot_dimension_numbers<[1], [0], [0], [1], [0, 0, 1, 1], [], []>} : vector<32x256xbf16>, vector<256x256xbf16>, vector<32x256xf32> -> vector<32x256xf32>
    %13 = arith.truncf %12 : vector<32x256xf32> to vector<32x256xbf16>
    %c0_9 = arith.constant 0 : index
    %c0_10 = arith.constant 0 : index
    %14 = vector.load %arg5[%c0_9, %c0_10] : memref<1x256xf32, #tpu.memory_space<vmem>>, vector<1x256xf32>
    %15 = arith.truncf %14 : vector<1x256xf32> to vector<1x256xbf16>
    %16 = vector.broadcast %15 : vector<1x256xbf16> to vector<32x256xbf16>
    %17 = arith.addf %13, %16 : vector<32x256xbf16>
    %cst_11 = arith.constant 0.000000e+00 : bf16
    %18 = vector.broadcast %cst_11 : bf16 to vector<32x256xbf16>
    %19 = arith.maximumf %17, %18 : vector<32x256xbf16>
    %c0_12 = arith.constant 0 : index
    %c0_13 = arith.constant 0 : index
    %20 = vector.load %arg6[%c0_12, %c0_13] : memref<256x128xbf16, #tpu.memory_space<vmem>>, vector<256x128xbf16>
    %cst_14 = arith.constant dense<0.000000e+00> : vector<32x128xf32>
    %21 = tpu.matmul %19, %20, %cst_14 {dimension_numbers = #tpu.dot_dimension_numbers<[1], [0], [0], [1], [0, 0, 1, 1], [], []>} : vector<32x256xbf16>, vector<256x128xbf16>, vector<32x128xf32> -> vector<32x128xf32>
    %22 = arith.truncf %21 : vector<32x128xf32> to vector<32x128xbf16>
    %c0_15 = arith.constant 0 : index
    %c0_16 = arith.constant 0 : index
    %23 = vector.load %arg7[%c0_15, %c0_16] : memref<1x128xf32, #tpu.memory_space<vmem>>, vector<1x128xf32>
    %24 = arith.truncf %23 : vector<1x128xf32> to vector<1x128xbf16>
    %25 = vector.broadcast %24 : vector<1x128xbf16> to vector<32x128xbf16>
    %26 = arith.addf %22, %25 : vector<32x128xbf16>
    %cst_17 = arith.constant 0.000000e+00 : bf16
    %27 = vector.broadcast %cst_17 : bf16 to vector<32x128xbf16>
    %28 = arith.maximumf %26, %27 : vector<32x128xbf16>
    %c0_18 = arith.constant 0 : index
    %c0_19 = arith.constant 0 : index
    %29 = vector.load %arg8[%c0_18, %c0_19] : memref<32x128xbf16, #tpu.memory_space<vmem>>, vector<32x128xbf16>
    tpu.vector_store %arg8[%c0_18, %c0_19], %28 {strides = array<i32>} : memref<32x128xbf16, #tpu.memory_space<vmem>>, vector<32x128xbf16>,
    return
  }
  func.func @transform_0(%arg0: i32) -> (i32, i32) {
    %c0_i32 = arith.constant 0 : i32
    %c0_i32_0 = arith.constant 0 : i32
    return %arg0, %c0_i32 : i32, i32
  }
  func.func @transform_1(%arg0: i32) -> (i32, i32) {
    %c0_i32 = arith.constant 0 : i32
    %c0_i32_0 = arith.constant 0 : i32
    %c0_i32_1 = arith.constant 0 : i32
    return %c0_i32, %c0_i32_0 : i32, i32
  }
  func.func @transform_2(%arg0: i32) -> (i32, i32) {
    %c0_i32 = arith.constant 0 : i32
    %c0_i32_0 = arith.constant 0 : i32
    %c0_i32_1 = arith.constant 0 : i32
    return %c0_i32, %c0_i32_0 : i32, i32
  }
  func.func @transform_3(%arg0: i32) -> (i32, i32) {
    %c0_i32 = arith.constant 0 : i32
    %c0_i32_0 = arith.constant 0 : i32
    %c0_i32_1 = arith.constant 0 : i32
    return %c0_i32, %c0_i32_0 : i32, i32
  }
  func.func @transform_4(%arg0: i32) -> (i32, i32) {
    %c0_i32 = arith.constant 0 : i32
    %c0_i32_0 = arith.constant 0 : i32
    %c0_i32_1 = arith.constant 0 : i32
    return %c0_i32, %c0_i32_0 : i32, i32
  }
  func.func @transform_5(%arg0: i32) -> (i32, i32) {
    %c0_i32 = arith.constant 0 : i32
    %c0_i32_0 = arith.constant 0 : i32
    %c0_i32_1 = arith.constant 0 : i32
    return %c0_i32, %c0_i32_0 : i32, i32
  }
  func.func @transform_6(%arg0: i32) -> (i32, i32) {
    %c0_i32 = arith.constant 0 : i32
    %c0_i32_0 = arith.constant 0 : i32
    %c0_i32_1 = arith.constant 0 : i32
    return %c0_i32, %c0_i32_0 : i32, i32
  }
  func.func @transform_7(%arg0: i32) -> (i32, i32) {
    %c0_i32 = arith.constant 0 : i32
    %c0_i32_0 = arith.constant 0 : i32
    return %arg0, %c0_i32 : i32, i32
  }
}

</mosaic_0001>

<llo_original>
// kernel: tpu_custom_call.1
$region0: #{tpu_custom_call.1}
  #allocation0 [shape = 'u32[]', space=smem, size = 0x4, offset = 0x4, fixed_abs, tag = 'smem constant byte address 0x4 - core index']
  #allocation1 [shape = 'u32[144,128]{1,0:T(1,128)}', space=vmem, size = 0x12000, scoped, tag = 'internal scratch']
  %s0 = inlined_call_operand.vmem [shape: f32[32,12], index: 0, kind: input, shape index: {}]
  %s1 = inlined_call_operand.vmem [shape: bf16[12,256], index: 1, kind: input, shape index: {}]
  %s2 = inlined_call_operand.vmem [shape: f32[1,256], index: 2, kind: input, shape index: {}]
  %s3 = inlined_call_operand.hbm [shape: bf16[256,256], index: 3, kind: input, shape index: {}]
  %s4 = inlined_call_operand.vmem [shape: f32[1,256], index: 4, kind: input, shape index: {}]
  %s5 = inlined_call_operand.hbm [shape: bf16[256,128], index: 5, kind: input, shape index: {}]
  %s6 = inlined_call_operand.vmem [shape: f32[1,128], index: 6, kind: input, shape index: {}]
  %s7 = inlined_call_operand.hbm [shape: bf16[32,128], index: 7, kind: output, shape index: {}]
  %s8 = sld [smem:[#allocation0]]
  $region46: #{tpu_custom_call.1} parent=0
    _
  %s10 = ssub.s32 1, %s8
  %s11 = scalar_select 0, %s10, %s8
  $region1: #{tpu_custom_call.1} parent=0
    #allocation2 [shape = 'u8[131072]{0}', space=vmem, size = 0x20000, scoped, tag = 'input window, operand 3, single buffered']
    #allocation3 [shape = 's32[1]{0}', space=sflag, size = 0x4, scoped, tag = 'scoped memory for tpu_custom_call.1']
    #allocation4 [shape = 's32[1]{0}', space=sflag, size = 0x4, scoped, tag = 'scoped memory for tpu_custom_call.1']
    #allocation5 [shape = 'u8[65536]{0}', space=vmem, size = 0x10000, scoped, tag = 'input window, operand 5, single buffered']
    #allocation6 [shape = 's32[1]{0}', space=sflag, size = 0x4, scoped, tag = 'scoped memory for tpu_custom_call.1']
    #allocation7 [shape = 'u8[8192]{0}', space=vmem, size = 0x2000, scoped, tag = 'output window, operand 0, single buffered']
    %12 = vsyncpa [#allocation3], 0
    %13 = vsyncpa [#allocation6], 0
    %14 = vsyncpa [#allocation4], 0
    // Predicated region
    $region2: #{tpu_custom_call.1} parent=1 // pred_check
      _
    $region3: #{tpu_custom_call.1} parent=1 // pred_check_branch
      %16 = sbr.rel (0) target = $region5
    $region4: #{tpu_custom_call.1} parent=1 // pred_region
      _
    $region5: #{tpu_custom_call.1} parent=1 // pred_fallthru
      _
    // Predicated region
    $region6: #{tpu_custom_call.1} parent=1 // pred_check
      _
    $region7: #{tpu_custom_call.1} parent=1 // pred_check_branch
      %18 = sbr.rel (0) target = $region9
    $region8: #{tpu_custom_call.1} parent=1 // pred_region
      _
    $region9: #{tpu_custom_call.1} parent=1 // pred_fallthru
      _
    // Predicated region
    $region10: #{tpu_custom_call.1} parent=1 // pred_check
      _
    $region11: #{tpu_custom_call.1} parent=1 // pred_check_branch
      %20 = sbr.rel (0) target = $region13
    $region12: #{tpu_custom_call.1} parent=1 // pred_region
      _
    $region13: #{tpu_custom_call.1} parent=1 // pred_fallthru
      _
    // Predicated region
    $region14: #{tpu_custom_call.1} parent=1 // pred_check
      _
    $region15: #{tpu_custom_call.1} parent=1 // pred_check_branch
      %22 = sbr.rel (0) target = $region17
    $region16: #{tpu_custom_call.1} parent=1 // pred_region
      %s24 = ssub.s32 4096, 4096
      %25 = vsyncadd [#allocation3], %s24
      %s26 = sshll.u32 [#allocation2], 4
      %s27 = int_to_ptr.vmem [resolvable:$true] %s26
      %32 = dma.hbm_to_vmem [thread:$0]  %s3, 4096, %s27, [#allocation3], 128, 128, 8
    $region17: #{tpu_custom_call.1} parent=1 // pred_fallthru
      _
    // Predicated region
    $region18: #{tpu_custom_call.1} parent=1 // pred_check
      _
    $region19: #{tpu_custom_call.1} parent=1 // pred_check_branch
      %34 = sbr.rel (0) target = $region21
    $region20: #{tpu_custom_call.1} parent=1 // pred_region
      _
    $region21: #{tpu_custom_call.1} parent=1 // pred_fallthru
      _
    // Predicated region
    $region22: #{tpu_custom_call.1} parent=1 // pred_check
      _
    $region23: #{tpu_custom_call.1} parent=1 // pred_check_branch
      %36 = sbr.rel (0) target = $region25
    $region24: #{tpu_custom_call.1} parent=1 // pred_region
      %s38 = ssub.s32 2048, 2048
      %39 = vsyncadd [#allocation6], %s38
      %s40 = sshll.u32 [#allocation5], 4
      %s41 = int_to_ptr.vmem [resolvable:$true] %s40
      %46 = dma.hbm_to_vmem [thread:$0]  %s5, 2048, %s41, [#allocation6], 64, 64, 4
    $region25: #{tpu_custom_call.1} parent=1 // pred_fallthru
      _
    // Predicated region
    $region26: #{tpu_custom_call.1} parent=1 // pred_check
      _
    $region27: #{tpu_custom_call.1} parent=1 // pred_check_branch
      %48 = sbr.rel (0) target = $region29
    $region28: #{tpu_custom_call.1} parent=1 // pred_region
      _
    $region29: #{tpu_custom_call.1} parent=1 // pred_fallthru
      _
    // Predicated region
    $region30: #{tpu_custom_call.1} parent=1 // pred_check
      _
    $region31: #{tpu_custom_call.1} parent=1 // pred_check_branch
      %50 = sbr.rel (0) target = $region33
    $region32: #{tpu_custom_call.1} parent=1 // pred_region
      %51 = dma.done [#allocation3], 4096
    $region33: #{tpu_custom_call.1} parent=1 // pred_fallthru
      _
    // Predicated region
    $region34: #{tpu_custom_call.1} parent=1 // pred_check
      _
    $region35: #{tpu_custom_call.1} parent=1 // pred_check_branch
      %53 = sbr.rel (0) target = $region37
    $region36: #{tpu_custom_call.1} parent=1 // pred_region
      %54 = dma.done [#allocation6], 2048
    $region37: #{tpu_custom_call.1} parent=1 // pred_fallthru
      _
    %v56 = vld [vmem:[%s0] sm:$0xff]
    %v57 = vld [vmem:[%s0 + $0x8] sm:$0xff]
    %v58 = vld [vmem:[%s0 + $0x10] sm:$0xff]
    %v59 = vld [vmem:[%s0 + $0x18] sm:$0xff]
    %v60 = vpack.c.bf16 %v57, %v56
    %v61 = vpack.c.bf16 %v59, %v58
    %v62 = vld [vmem:[%s1] sm:$0xff]
    %v63 = vld [vmem:[%s1 + $0x8] sm:$0x33]
    %v66 = vunpack.c.l.b16 %v62
    %v67 = vunpack.c.h.b16 %v62
    %v68 = vunpack.c.l.b16 %v63
    %v69 = vunpack.c.h.b16 %v63
    %v70 = vpack.c.b16 %v68, %v66
    %v71 = vpack.c.b16 %v69, %v67
    %vm72 = vcmask 97280
    %v74 = vsel %vm72, %v60, 0
    %v77 = vsel %vm72, %v61, 0
    %vm79 = vcmask 1045504
    %v81 = vsel %vm79, %v70, 0
    %v84 = vsel %vm79, %v71, 0
    %86 = vmatprep.subr.bf16.mxu0 %v84
    %87 = vmatpush1.bf16.msra.mxu0 %v81
    %88 = vmatprep.subr.bf16.mxu0 0
    %89 = vmatpush1.bf16.msra.mxu0 0
    %90 = vmatprep.subr.bf16.mxu0 0
    %91 = vmatpush1.bf16.msra.mxu0 0
    %92 = vmatprep.subr.bf16.mxu0 0
    %93 = vmatpush1.bf16.msra.mxu0 0
    %94 = vmatprep.subr.bf16.mxu0 0
    %95 = vmatpush1.bf16.msra.mxu0 0
    %96 = vmatprep.subr.bf16.mxu0 0
    %97 = vmatpush1.bf16.msra.mxu0 0
    %98 = vmatprep.subr.bf16.mxu0 0
    %99 = vmatpush1.bf16.msra.mxu0 0
    %100 = vmatprep.subr.bf16.mxu0 0
    %101 = vmatpush1.bf16.msra.mxu0 0
    %102 = vmatprep.subr.bf16.mxu0 0
    %103 = vmatpush1.bf16.msra.mxu0 0
    %104 = vmatprep.subr.bf16.mxu0 0
    %105 = vmatpush1.bf16.msra.mxu0 0
    %106 = vmatprep.subr.bf16.mxu0 0
    %107 = vmatpush1.bf16.msra.mxu0 0
    %108 = vmatprep.subr.bf16.mxu0 0
    %109 = vmatpush1.bf16.msra.mxu0 0
    %110 = vmatprep.subr.bf16.mxu0 0
    %111 = vmatpush1.bf16.msra.mxu0 0
    %112 = vmatprep.subr.bf16.mxu0 0
    %113 = vmatpush1.bf16.msra.mxu0 0
    %114 = vmatprep.subr.bf16.mxu0 0
    %115 = vmatpush1.bf16.msra.mxu0 0
    %116 = vmatprep.subr.bf16.mxu0 0
    %117 = vmatpush1.bf16.msra.mxu0 0
    %118 = vmatprep.mubr.bf16.mxu0 0
    %119 = vmatmul.mubr.bf16.gmra.mrb[0].mxu0 %v74
    %v120 = vpop.f32.mrb[0].mxu0
    %v121 = vadd.f32 0.0, %v120
    %v122 = vpop.f32.mrb[0].mxu0
    %v123 = vadd.f32 0.0, %v122
    %v124 = vpop.f32.mrb[0].mxu0
    %v125 = vadd.f32 0.0, %v124
    %v126 = vpop.f32.mrb[0].mxu0
    %v127 = vadd.f32 0.0, %v126
    %128 = vmatprep.mubr.bf16.mxu0 0
    %129 = vmatmul.mubr.bf16.gmra.mrb[0].mxu0 %v77
    %v130 = vpop.f32.mrb[0].mxu0
    %v131 = vadd.f32 0.0, %v130
    %v132 = vpop.f32.mrb[0].mxu0
    %v133 = vadd.f32 0.0, %v132
    %v134 = vpop.f32.mrb[0].mxu0
    %v135 = vadd.f32 0.0, %v134
    %v136 = vpop.f32.mrb[0].mxu0
    %v137 = vadd.f32 0.0, %v136
    %138 = vdwg.mxu0
    %v139 = vpack.c.bf16 %v125, %v121
    %v140 = vpack.c.bf16 %v127, %v123
    %v141 = vpack.c.bf16 %v135, %v131
    %v142 = vpack.c.bf16 %v137, %v133
    %v143 = vld [vmem:[%s2] sm:$0x3]
    %v145 = vlaneseq
    %v146 = vshrl.u32 %v145, 7
    %v147 = vsub.s32 0, %v146
    %v148 = vrot.slane %v143, %v147
    %v149 = vlaneseq
    %v150 = vshrl.u32 %v149, 7
    %v151 = vsub.s32 1, %v150
    %v152 = vrot.slane %v143, %v151
    %v155 = vpack.c.bf16 %v148, %v148
    %v156 = vpack.c.bf16 %v152, %v152
    %v158 = vpack.i.b16 %v155, %v155
    %v160 = vlaneseq
    %v161 = vshrl.u32 %v160, 7
    %v162 = vsub.s32 0, %v161
    %v163 = vrot.slane %v158, %v162
    %v165 = vpack.i.b16 %v156, %v156
    %v167 = vlaneseq
    %v168 = vshrl.u32 %v167, 7
    %v169 = vsub.s32 0, %v168
    %v170 = vrot.slane %v165, %v169
    %v171 = vadd.bf16 %v139, %v163
    %v172 = vadd.bf16 %v140, %v170
    %v173 = vadd.bf16 %v141, %v163
    %v174 = vadd.bf16 %v142, %v170
    %v175 = vmax.bf16 %v171, 0
    %v176 = vmax.bf16 %v172, 0
    %v177 = vmax.bf16 %v173, 0
    %v178 = vmax.bf16 %v174, 0
    %v179 = vld [vmem:[#allocation2] sm:$0xff]
    %v180 = vld [vmem:[#allocation2 + $0x8] sm:$0xff]
    %v181 = vld [vmem:[#allocation2 + $0x10] sm:$0xff]
    %v182 = vld [vmem:[#allocation2 + $0x18] sm:$0xff]
    %v183 = vld [vmem:[#allocation2 + $0x20] sm:$0xff]
    %v184 = vld [vmem:[#allocation2 + $0x28] sm:$0xff]
    %v185 = vld [vmem:[#allocation2 + $0x30] sm:$0xff]
    %v186 = vld [vmem:[#allocation2 + $0x38] sm:$0xff]
    %v187 = vld [vmem:[#allocation2 + $0x40] sm:$0xff]
    %v188 = vld [vmem:[#allocation2 + $0x48] sm:$0xff]
    %v189 = vld [vmem:[#allocation2 + $0x50] sm:$0xff]
    %v190 = vld [vmem:[#allocation2 + $0x58] sm:$0xff]
    %v191 = vld [vmem:[#allocation2 + $0x60] sm:$0xff]
    %v192 = vld [vmem:[#allocation2 + $0x68] sm:$0xff]
    %v193 = vld [vmem:[#allocation2 + $0x70] sm:$0xff]
    %v194 = vld [vmem:[#allocation2 + $0x78] sm:$0xff]
    %v195 = vld [vmem:[#allocation2 + $0x80] sm:$0xff]
    %v196 = vld [vmem:[#allocation2 + $0x88] sm:$0xff]
    %v197 = vld [vmem:[#allocation2 + $0x90] sm:$0xff]
    %v198 = vld [vmem:[#allocation2 + $0x98] sm:$0xff]
    %v199 = vld [vmem:[#allocation2 + $0xa0] sm:$0xff]
    %v200 = vld [vmem:[#allocation2 + $0xa8] sm:$0xff]
    %v201 = vld [vmem:[#allocation2 + $0xb0] sm:$0xff]
    %v202 = vld [vmem:[#allocation2 + $0xb8] sm:$0xff]
    %v203 = vld [vmem:[#allocation2 + $0xc0] sm:$0xff]
    %v204 = vld [vmem:[#allocation2 + $0xc8] sm:$0xff]
    %v205 = vld [vmem:[#allocation2 + $0xd0] sm:$0xff]
    %v206 = vld [vmem:[#allocation2 + $0xd8] sm:$0xff]
    %v207 = vld [vmem:[#allocation2 + $0xe0] sm:$0xff]
    %v208 = vld [vmem:[#allocation2 + $0xe8] sm:$0xff]
    %v209 = vld [vmem:[#allocation2 + $0xf0] sm:$0xff]
    %v210 = vld [vmem:[#allocation2 + $0xf8] sm:$0xff]
    %v243 = vunpack.c.l.b16 %v179
    %v244 = vunpack.c.h.b16 %v179
    %v245 = vunpack.c.l.b16 %v180
    %v246 = vunpack.c.h.b16 %v180
    %v247 = vunpack.c.l.b16 %v181
    %v248 = vunpack.c.h.b16 %v181
    %v249 = vunpack.c.l.b16 %v182
    %v250 = vunpack.c.h.b16 %v182
    %v251 = vunpack.c.l.b16 %v183
    %v252 = vunpack.c.h.b16 %v183
    %v253 = vunpack.c.l.b16 %v184
    %v254 = vunpack.c.h.b16 %v184
    %v255 = vunpack.c.l.b16 %v185
    %v256 = vunpack.c.h.b16 %v185
    %v257 = vunpack.c.l.b16 %v186
    %v258 = vunpack.c.h.b16 %v186
    %v259 = vunpack.c.l.b16 %v187
    %v260 = vunpack.c.h.b16 %v187
    %v261 = vunpack.c.l.b16 %v188
    %v262 = vunpack.c.h.b16 %v188
    %v263 = vunpack.c.l.b16 %v189
    %v264 = vunpack.c.h.b16 %v189
    %v265 = vunpack.c.l.b16 %v190
    %v266 = vunpack.c.h.b16 %v190
    %v267 = vunpack.c.l.b16 %v191
    %v268 = vunpack.c.h.b16 %v191
    %v269 = vunpack.c.l.b16 %v192
    %v270 = vunpack.c.h.b16 %v192
    %v271 = vunpack.c.l.b16 %v193
    %v272 = vunpack.c.h.b16 %v193
    %v273 = vunpack.c.l.b16 %v194
    %v274 = vunpack.c.h.b16 %v194
    %v275 = vunpack.c.l.b16 %v195
    %v276 = vunpack.c.h.b16 %v195
    %v277 = vunpack.c.l.b16 %v196
    %v278 = vunpack.c.h.b16 %v196
    %v279 = vunpack.c.l.b16 %v197
    %v280 = vunpack.c.h.b16 %v197
    %v281 = vunpack.c.l.b16 %v198
    %v282 = vunpack.c.h.b16 %v198
    %v283 = vunpack.c.l.b16 %v199
    %v284 = vunpack.c.h.b16 %v199
    %v285 = vunpack.c.l.b16 %v200
    %v286 = vunpack.c.h.b16 %v200
    %v287 = vunpack.c.l.b16 %v201
    %v288 = vunpack.c.h.b16 %v201
    %v289 = vunpack.c.l.b16 %v202
    %v290 = vunpack.c.h.b16 %v202
    %v291 = vunpack.c.l.b16 %v203
    %v292 = vunpack.c.h.b16 %v203
    %v293 = vunpack.c.l.b16 %v204
    %v294 = vunpack.c.h.b16 %v204
    %v295 = vunpack.c.l.b16 %v205
    %v296 = vunpack.c.h.b16 %v205
    %v297 = vunpack.c.l.b16 %v206
    %v298 = vunpack.c.h.b16 %v206
    %v299 = vunpack.c.l.b16 %v207
    %v300 = vunpack.c.h.b16 %v207
    %v301 = vunpack.c.l.b16 %v208
    %v302 = vunpack.c.h.b16 %v208
    %v303 = vunpack.c.l.b16 %v209
    %v304 = vunpack.c.h.b16 %v209
    %v305 = vunpack.c.l.b16 %v210
    %v306 = vunpack.c.h.b16 %v210
    %v307 = vpack.c.b16 %v245, %v243
    %v308 = vpack.c.b16 %v246, %v244
    %v309 = vpack.c.b16 %v249, %v247
    %v310 = vpack.c.b16 %v250, %v248
    %v311 = vpack.c.b16 %v253, %v251
    %v312 = vpack.c.b16 %v254, %v252
    %v313 = vpack.c.b16 %v257, %v255
    %v314 = vpack.c.b16 %v258, %v256
    %v315 = vpack.c.b16 %v261, %v259
    %v316 = vpack.c.b16 %v262, %v260
    %v317 = vpack.c.b16 %v265, %v263
    %v318 = vpack.c.b16 %v266, %v264
    %v319 = vpack.c.b16 %v269, %v267
    %v320 = vpack.c.b16 %v270, %v268
    %v321 = vpack.c.b16 %v273, %v271
    %v322 = vpack.c.b16 %v274, %v272
    %v323 = vpack.c.b16 %v277, %v275
    %v324 = vpack.c.b16 %v278, %v276
    %v325 = vpack.c.b16 %v281, %v279
    %v326 = vpack.c.b16 %v282, %v280
    %v327 = vpack.c.b16 %v285, %v283
    %v328 = vpack.c.b16 %v286, %v284
    %v329 = vpack.c.b16 %v289, %v287
    %v330 = vpack.c.b16 %v290, %v288
    %v331 = vpack.c.b16 %v293, %v291
    %v332 = vpack.c.b16 %v294, %v292
    %v333 = vpack.c.b16 %v297, %v295
    %v334 = vpack.c.b16 %v298, %v296
    %v335 = vpack.c.b16 %v301, %v299
    %v336 = vpack.c.b16 %v302, %v300
    %v337 = vpack.c.b16 %v305, %v303
    %v338 = vpack.c.b16 %v306, %v304
    %371 = vmatprep.subr.bf16.mxu0 %v308
    %372 = vmatpush1.bf16.msra.mxu0 %v307
    %373 = vmatprep.subr.bf16.mxu0 %v310
    %374 = vmatpush1.bf16.msra.mxu0 %v309
    %375 = vmatprep.subr.bf16.mxu0 %v312
    %376 = vmatpush1.bf16.msra.mxu0 %v311
    %377 = vmatprep.subr.bf16.mxu0 %v314
    %378 = vmatpush1.bf16.msra.mxu0 %v313
    %379 = vmatprep.subr.bf16.mxu0 %v316
    %380 = vmatpush1.bf16.msra.mxu0 %v315
    %381 = vmatprep.subr.bf16.mxu0 %v318
    %382 = vmatpush1.bf16.msra.mxu0 %v317
    %383 = vmatprep.subr.bf16.mxu0 %v320
    %384 = vmatpush1.bf16.msra.mxu0 %v319
    %385 = vmatprep.subr.bf16.mxu0 %v322
    %386 = vmatpush1.bf16.msra.mxu0 %v321
    %387 = vmatprep.subr.bf16.mxu0 %v324
    %388 = vmatpush1.bf16.msra.mxu0 %v323
    %389 = vmatprep.subr.bf16.mxu0 %v326
    %390 = vmatpush1.bf16.msra.mxu0 %v325
    %391 = vmatprep.subr.bf16.mxu0 %v328
    %392 = vmatpush1.bf16.msra.mxu0 %v327
    %393 = vmatprep.subr.bf16.mxu0 %v330
    %394 = vmatpush1.bf16.msra.mxu0 %v329
    %395 = vmatprep.subr.bf16.mxu0 %v332
    %396 = vmatpush1.bf16.msra.mxu0 %v331
    %397 = vmatprep.subr.bf16.mxu0 %v334
    %398 = vmatpush1.bf16.msra.mxu0 %v333
    %399 = vmatprep.subr.bf16.mxu0 %v336
    %400 = vmatpush1.bf16.msra.mxu0 %v335
    %401 = vmatprep.subr.bf16.mxu0 %v338
    %402 = vmatpush1.bf16.msra.mxu0 %v337
    %403 = vmatprep.mubr.bf16.mxu0 %v176
    %404 = vmatmul.mubr.bf16.gmra.mrb[0].mxu0 %v175
    %v405 = vpop.f32.mrb[0].mxu0
    %v406 = vadd.f32 0.0, %v405
    %v407 = vpop.f32.mrb[0].mxu0
    %v408 = vadd.f32 0.0, %v407
    %v409 = vpop.f32.mrb[0].mxu0
    %v410 = vadd.f32 0.0, %v409
    %v411 = vpop.f32.mrb[0].mxu0
    %v412 = vadd.f32 0.0, %v411
    %413 = vmatprep.mubr.bf16.mxu0 %v178
    %414 = vmatmul.mubr.bf16.gmra.mrb[0].mxu0 %v177
    %v415 = vpop.f32.mrb[0].mxu0
    %v416 = vadd.f32 0.0, %v415
    %v417 = vpop.f32.mrb[0].mxu0
    %v418 = vadd.f32 0.0, %v417
    %v419 = vpop.f32.mrb[0].mxu0
    %v420 = vadd.f32 0.0, %v419
    %v421 = vpop.f32.mrb[0].mxu0
    %v422 = vadd.f32 0.0, %v421
    %423 = vdwg.mxu0
    %v424 = vpack.c.bf16 %v410, %v406
    %v425 = vpack.c.bf16 %v412, %v408
    %v426 = vpack.c.bf16 %v420, %v416
    %v427 = vpack.c.bf16 %v422, %v418
    %v428 = vld [vmem:[%s4] sm:$0x3]
    %v430 = vlaneseq
    %v431 = vshrl.u32 %v430, 7
    %v432 = vsub.s32 0, %v431
    %v433 = vrot.slane %v428, %v432
    %v434 = vlaneseq
    %v435 = vshrl.u32 %v434, 7
    %v436 = vsub.s32 1, %v435
    %v437 = vrot.slane %v428, %v436
    %v440 = vpack.c.bf16 %v433, %v433
    %v441 = vpack.c.bf16 %v437, %v437
    %v443 = vpack.i.b16 %v440, %v440
    %v445 = vlaneseq
    %v446 = vshrl.u32 %v445, 7
    %v447 = vsub.s32 0, %v446
    %v448 = vrot.slane %v443, %v447
    %v450 = vpack.i.b16 %v441, %v441
    %v452 = vlaneseq
    %v453 = vshrl.u32 %v452, 7
    %v454 = vsub.s32 0, %v453
    %v455 = vrot.slane %v450, %v454
    %v456 = vadd.bf16 %v424, %v448
    %v457 = vadd.bf16 %v425, %v455
    %v458 = vadd.bf16 %v426, %v448
    %v459 = vadd.bf16 %v427, %v455
    %v460 = vmax.bf16 %v456, 0
    %v461 = vmax.bf16 %v457, 0
    %v462 = vmax.bf16 %v458, 0
    %v463 = vmax.bf16 %v459, 0
    %v464 = vld [vmem:[#allocation5] sm:$0xf]
    %v465 = vld [vmem:[#allocation5 + $0x4] sm:$0xf]
    %v466 = vld [vmem:[#allocation5 + $0x8] sm:$0xf]
    %v467 = vld [vmem:[#allocation5 + $0xc] sm:$0xf]
    %v468 = vld [vmem:[#allocation5 + $0x10] sm:$0xf]
    %v469 = vld [vmem:[#allocation5 + $0x14] sm:$0xf]
    %v470 = vld [vmem:[#allocation5 + $0x18] sm:$0xf]
    %v471 = vld [vmem:[#allocation5 + $0x1c] sm:$0xf]
    %v472 = vld [vmem:[#allocation5 + $0x20] sm:$0xf]
    %v473 = vld [vmem:[#allocation5 + $0x24] sm:$0xf]
    %v474 = vld [vmem:[#allocation5 + $0x28] sm:$0xf]
    %v475 = vld [vmem:[#allocation5 + $0x2c] sm:$0xf]
    %v476 = vld [vmem:[#allocation5 + $0x30] sm:$0xf]
    %v477 = vld [vmem:[#allocation5 + $0x34] sm:$0xf]
    %v478 = vld [vmem:[#allocation5 + $0x38] sm:$0xf]
    %v479 = vld [vmem:[#allocation5 + $0x3c] sm:$0xf]
    %v480 = vld [vmem:[#allocation5 + $0x40] sm:$0xf]
    %v481 = vld [vmem:[#allocation5 + $0x44] sm:$0xf]
    %v482 = vld [vmem:[#allocation5 + $0x48] sm:$0xf]
    %v483 = vld [vmem:[#allocation5 + $0x4c] sm:$0xf]
    %v484 = vld [vmem:[#allocation5 + $0x50] sm:$0xf]
    %v485 = vld [vmem:[#allocation5 + $0x54] sm:$0xf]
    %v486 = vld [vmem:[#allocation5 + $0x58] sm:$0xf]
    %v487 = vld [vmem:[#allocation5 + $0x5c] sm:$0xf]
    %v488 = vld [vmem:[#allocation5 + $0x60] sm:$0xf]
    %v489 = vld [vmem:[#allocation5 + $0x64] sm:$0xf]
    %v490 = vld [vmem:[#allocation5 + $0x68] sm:$0xf]
    %v491 = vld [vmem:[#allocation5 + $0x6c] sm:$0xf]
    %v492 = vld [vmem:[#allocation5 + $0x70] sm:$0xf]
    %v493 = vld [vmem:[#allocation5 + $0x74] sm:$0xf]
    %v494 = vld [vmem:[#allocation5 + $0x78] sm:$0xf]
    %v495 = vld [vmem:[#allocation5 + $0x7c] sm:$0xf]
    %v528 = vunpack.c.l.b16 %v464
    %v529 = vunpack.c.l.b16 %v465
    %v530 = vunpack.c.l.b16 %v466
    %v531 = vunpack.c.l.b16 %v467
    %v532 = vunpack.c.l.b16 %v468
    %v533 = vunpack.c.l.b16 %v469
    %v534 = vunpack.c.l.b16 %v470
    %v535 = vunpack.c.l.b16 %v471
    %v536 = vunpack.c.l.b16 %v472
    %v537 = vunpack.c.l.b16 %v473
    %v538 = vunpack.c.l.b16 %v474
    %v539 = vunpack.c.l.b16 %v475
    %v540 = vunpack.c.l.b16 %v476
    %v541 = vunpack.c.l.b16 %v477
    %v542 = vunpack.c.l.b16 %v478
    %v543 = vunpack.c.l.b16 %v479
    %v544 = vunpack.c.l.b16 %v480
    %v545 = vunpack.c.l.b16 %v481
    %v546 = vunpack.c.l.b16 %v482
    %v547 = vunpack.c.l.b16 %v483
    %v548 = vunpack.c.l.b16 %v484
    %v549 = vunpack.c.l.b16 %v485
    %v550 = vunpack.c.l.b16 %v486
    %v551 = vunpack.c.l.b16 %v487
    %v552 = vunpack.c.l.b16 %v488
    %v553 = vunpack.c.l.b16 %v489
    %v554 = vunpack.c.l.b16 %v490
    %v555 = vunpack.c.l.b16 %v491
    %v556 = vunpack.c.l.b16 %v492
    %v557 = vunpack.c.l.b16 %v493
    %v558 = vunpack.c.l.b16 %v494
    %v559 = vunpack.c.l.b16 %v495
    %v560 = vpack.c.b16 %v529, %v528
    %v561 = vpack.c.b16 %v531, %v530
    %v562 = vpack.c.b16 %v533, %v532
    %v563 = vpack.c.b16 %v535, %v534
    %v564 = vpack.c.b16 %v537, %v536
    %v565 = vpack.c.b16 %v539, %v538
    %v566 = vpack.c.b16 %v541, %v540
    %v567 = vpack.c.b16 %v543, %v542
    %v568 = vpack.c.b16 %v545, %v544
    %v569 = vpack.c.b16 %v547, %v546
    %v570 = vpack.c.b16 %v549, %v548
    %v571 = vpack.c.b16 %v551, %v550
    %v572 = vpack.c.b16 %v553, %v552
    %v573 = vpack.c.b16 %v555, %v554
    %v574 = vpack.c.b16 %v557, %v556
    %v575 = vpack.c.b16 %v559, %v558
    %592 = vmatprep.subr.bf16.mxu0 0
    %593 = vmatpush1.bf16.msra.mxu0 %v560
    %594 = vmatprep.subr.bf16.mxu0 0
    %595 = vmatpush1.bf16.msra.mxu0 %v561
    %596 = vmatprep.subr.bf16.mxu0 0
    %597 = vmatpush1.bf16.msra.mxu0 %v562
    %598 = vmatprep.subr.bf16.mxu0 0
    %599 = vmatpush1.bf16.msra.mxu0 %v563
    %600 = vmatprep.subr.bf16.mxu0 0
    %601 = vmatpush1.bf16.msra.mxu0 %v564
    %602 = vmatprep.subr.bf16.mxu0 0
    %603 = vmatpush1.bf16.msra.mxu0 %v565
    %604 = vmatprep.subr.bf16.mxu0 0
    %605 = vmatpush1.bf16.msra.mxu0 %v566
    %606 = vmatprep.subr.bf16.mxu0 0
    %607 = vmatpush1.bf16.msra.mxu0 %v567
    %608 = vmatprep.subr.bf16.mxu0 0
    %609 = vmatpush1.bf16.msra.mxu0 %v568
    %610 = vmatprep.subr.bf16.mxu0 0
    %611 = vmatpush1.bf16.msra.mxu0 %v569
    %612 = vmatprep.subr.bf16.mxu0 0
    %613 = vmatpush1.bf16.msra.mxu0 %v570
    %614 = vmatprep.subr.bf16.mxu0 0
    %615 = vmatpush1.bf16.msra.mxu0 %v571
    %616 = vmatprep.subr.bf16.mxu0 0
    %617 = vmatpush1.bf16.msra.mxu0 %v572
    %618 = vmatprep.subr.bf16.mxu0 0
    %619 = vmatpush1.bf16.msra.mxu0 %v573
    %620 = vmatprep.subr.bf16.mxu0 0
    %621 = vmatpush1.bf16.msra.mxu0 %v574
    %622 = vmatprep.subr.bf16.mxu0 0
    %623 = vmatpush1.bf16.msra.mxu0 %v575
    %624 = vmatprep.mubr.bf16.mxu0 %v461
    %625 = vmatmul.mubr.bf16.gmra.mrb[0].mxu0 %v460
    %v626 = vpop.f32.mrb[0].mxu0
    %v627 = vadd.f32 0.0, %v626
    %v628 = vpop.f32.mrb[0].mxu0
    %v629 = vpop.f32.mrb[0].mxu0
    %v630 = vadd.f32 0.0, %v629
    %v631 = vpop.f32.mrb[0].mxu0
    %632 = vmatprep.mubr.bf16.mxu0 %v463
    %633 = vmatmul.mubr.bf16.gmra.mrb[0].mxu0 %v462
    %v634 = vpop.f32.mrb[0].mxu0
    %v635 = vadd.f32 0.0, %v634
    %v636 = vpop.f32.mrb[0].mxu0
    %v637 = vpop.f32.mrb[0].mxu0
    %v638 = vadd.f32 0.0, %v637
    %v639 = vpop.f32.mrb[0].mxu0
    %640 = vdwg.mxu0
    %v641 = vpack.c.bf16 %v630, %v627
    %v642 = vpack.c.bf16 %v638, %v635
    %v643 = vld [vmem:[%s6] sm:$0x1]
    %v644 = vpack.c.bf16 %v643, %v643
    %v646 = vpack.i.b16 %v644, %v644
    %v648 = vlaneseq
    %v649 = vshrl.u32 %v648, 7
    %v650 = vsub.s32 0, %v649
    %v651 = vrot.slane %v646, %v650
    %v652 = vadd.bf16 %v641, %v651
    %v653 = vadd.bf16 %v642, %v651
    %v654 = vmax.bf16 %v652, 0
    %v655 = vmax.bf16 %v653, 0
    %v658 = vunpack.c.l.b16 %v654
    %v659 = vunpack.c.h.b16 %v654
    %v660 = vunpack.c.l.b16 %v655
    %v661 = vunpack.c.h.b16 %v655
    %v662 = vpack.c.b16 %v658, %v658
    %v663 = vpack.c.b16 %v659, %v659
    %v664 = vpack.c.b16 %v660, %v660
    %v665 = vpack.c.b16 %v661, %v661
    %670 = vst [vmem:[#allocation7] sm:$0xf] %v662
    %671 = vst [vmem:[#allocation7 + $0x4] sm:$0xf] %v663
    %672 = vst [vmem:[#allocation7 + $0x8] sm:$0xf] %v664
    %673 = vst [vmem:[#allocation7 + $0xc] sm:$0xf] %v665
    // Predicated region
    $region38: #{tpu_custom_call.1} parent=1 // pred_check
      _
    $region39: #{tpu_custom_call.1} parent=1 // pred_check_branch
      %675 = sbr.rel (0) target = $region41
    $region40: #{tpu_custom_call.1} parent=1 // pred_region
      %s677 = ssub.s32 256, 256
      %678 = vsyncadd [#allocation4], %s677
      %s679 = sshll.u32 [#allocation7], 4
      %s680 = int_to_ptr.vmem [resolvable:$true] %s679
      %685 = dma.vmem_to_hbm [thread:$0]  %s680, 256, %s7, [#allocation4], 64, 64, 4
    $region41: #{tpu_custom_call.1} parent=1 // pred_fallthru
      _
    // Predicated region
    $region42: #{tpu_custom_call.1} parent=1 // pred_check
      _
    $region43: #{tpu_custom_call.1} parent=1 // pred_check_branch
      %687 = sbr.rel (0) target = $region45
    $region44: #{tpu_custom_call.1} parent=1 // pred_region
      %688 = dma.done [#allocation4], 256
    $region45: #{tpu_custom_call.1} parent=1 // pred_fallthru
      _
    %689 = vsyncpa [#allocation3], 1
    %690 = vsyncpa [#allocation6], 1
    %691 = vsyncpa [#allocation4], 1

</llo_original>
